<compile_context>
chip_gen: v7x
topology: tpu7x:2x2x1
jax: 0.10.0
libtpu: 0.0.40
codegen_flags: <defaults>
</compile_context>

<pallas_src>
import math

import numpy as np
import jax
import jax.numpy as jnp
from jax.experimental import pallas as pl
from jax.experimental.pallas import tpu as pltpu


def _data_embedding_kernel(x_ref, w_ref, pe_ref, o_ref):
    """One grid step.

    x_ref : (bB, L, c_in)  raw inputs; full L per block so the circular halo is local
    w_ref : (3, c_in, bn)  Conv1d weight, kernel-tap major
    pe_ref: (L, bn)        positional-embedding tile (float32)
    o_ref : (bB, L, bn)
    """
    bB, L, _ = x_ref.shape
    w_prev = w_ref[0]
    w_cent = w_ref[1]
    w_next = w_ref[2]
    dot_dt = w_prev.dtype
    pe = pe_ref[...]                                          # (L, bn) f32

    for b in range(bB):                                       # small static unroll
        # Load one sequence; build the circular halo in f32 (unpacked layout).
        xc = x_ref[b].astype(jnp.float32)                     # (L, c_in)
        x_prev = jnp.roll(xc, 1, axis=0)                      # x[(t-1) mod L]
        x_next = jnp.roll(xc, -1, axis=0)                     # x[(t+1) mod L]
        # Circular Conv1d(k=3, pad=1, no bias) as three MXU dots, f32 accumulation.
        acc = jnp.dot(x_prev.astype(dot_dt), w_prev,
                      preferred_element_type=jnp.float32)
        acc = acc + jnp.dot(xc.astype(dot_dt), w_cent,
                            preferred_element_type=jnp.float32)
        acc = acc + jnp.dot(x_next.astype(dot_dt), w_next,
                            preferred_element_type=jnp.float32)
        # TODO(synk): nn.Dropout(p=0.1) is identity in eval mode; training-mode
        # dropout would need pltpu.prng_seed/prng_random_bits masking.
        o_ref[b] = (acc + pe).astype(o_ref.dtype)


def data_embedding(x, w_kcd, pe, *, block_n=512, block_b=None,
                   compute_dtype=None, out_dtype=None):
    """DataEmbedding forward.

    x:     [B, L, c_in]   (channels-last; PyTorch module permutes to NCW internally)
    w_kcd: [3, c_in, d_model]  Conv1d weight, kernel-tap major
    pe:    [L, d_model]   fixed positional-embedding table slice
    """
    B, L, c_in = x.shape
    d_model = w_kcd.shape[-1]
    out_dtype = x.dtype if out_dtype is None else out_dtype

    # --- lane-dense output: pad d_model up to a multiple of 128 -------------
    d_model_p = ((d_model + 127) // 128) * 128
    d_pad = d_model_p - d_model
    pe = pe.astype(jnp.float32)
    if d_pad:
        w_kcd = jnp.pad(w_kcd, ((0, 0), (0, 0), (0, d_pad)))
        pe = jnp.pad(pe, ((0, 0), (0, d_pad)))

    # --- wrapper-side cast: actually halves input DMA bytes -----------------
    if compute_dtype is not None:
        x = x.astype(compute_dtype)
        w_kcd = w_kcd.astype(compute_dtype)

    # --- d_model tile: largest multiple of 128 <= block_n that divides ------
    bn = min(max(128, (block_n // 128) * 128), d_model_p)
    while d_model_p % bn:
        bn -= 128
    n_d = d_model_p // bn

    # --- batch tile: fold batch into the block for bigger grid steps --------
    if block_b is None:
        block_b = max(1, min(B, 512 // max(L, 1)))
        # Keep >=2 grid steps when possible so megacore (v7x) can shard work.
        if n_d * pl.cdiv(B, block_b) < 2 and B > 1:
            block_b = max(1, B // 2)
    block_b = max(1, min(block_b, B))
    while B % block_b:
        block_b -= 1
    n_b = B // block_b

    out = pl.pallas_call(
        _data_embedding_kernel,
        out_shape=jax.ShapeDtypeStruct((B, L, d_model_p), out_dtype),
        # Batch axis innermost -> w/pe block indices are constant across it,
        # so they are reused (no re-DMA per batch element).
        grid=(n_d, n_b),
        in_specs=[
            pl.BlockSpec((block_b, L, c_in), lambda nd, nb: (nb, 0, 0)),
            pl.BlockSpec((3, c_in, bn), lambda nd, nb: (0, 0, nd)),
            pl.BlockSpec((L, bn), lambda nd, nb: (0, nd)),
        ],
        out_specs=pl.BlockSpec((block_b, L, bn), lambda nd, nb: (nb, 0, nd)),
        compiler_params=pltpu.CompilerParams(
            dimension_semantics=("parallel", "parallel")),
    )(x, w_kcd, pe)

    return out[..., :d_model] if d_pad else out


def positional_embedding(L, d_model):
    position = jnp.arange(L, dtype=jnp.float32)[:, None]                 # (L, 1)
    div_term = jnp.exp(jnp.arange(0, d_model, 2, dtype=jnp.float32)
                       * -(math.log(10000.0) / d_model))                 # (d_model/2,)
    pe = jnp.zeros((L, d_model), jnp.float32)
    pe = pe.at[:, 0::2].set(jnp.sin(position * div_term))
    pe = pe.at[:, 1::2].set(jnp.cos(position * div_term))
    return pe


def init_token_conv_weight(key, c_in, d_model):
    # nn.init.kaiming_normal_(weight, mode='fan_in', nonlinearity='leaky_relu')
    # PyTorch Conv1d weight shape: (d_model, c_in, 3); fan_in = c_in * 3.
    fan_in = c_in * 3
    gain = math.sqrt(2.0)
    std = gain / math.sqrt(fan_in)
    return jax.random.normal(key, (d_model, c_in, 3), dtype=jnp.float32) * std


def reference_data_embedding(x, w_dck, pe):
    # Pure-JAX reference: circular conv1d k=3 pad=1 no-bias, + positional emb.
    # out[b, t, d] = sum_{c,k} x[b, (t-1+k) mod L, c] * W[d, c, k]
    x_prev = jnp.roll(x, 1, axis=1)
    x_next = jnp.roll(x, -1, axis=1)
    out = (jnp.einsum('blc,dc->bld', x_prev, w_dck[:, :, 0])
           + jnp.einsum('blc,dc->bld', x,      w_dck[:, :, 1])
           + jnp.einsum('blc,dc->bld', x_next, w_dck[:, :, 2]))
    return out + pe[None]


def _run_case(key, B, L, c_in, d_model):
    kx, kw = jax.random.split(key)
    x = jax.random.normal(kx, (B, L, c_in), dtype=jnp.float32)
    w_dck = init_token_conv_weight(kw, c_in, d_model)          # (d_model, c_in, 3)
    w_kcd = jnp.transpose(w_dck, (2, 1, 0))                    # (3, c_in, d_model)
    pe = positional_embedding(L, d_model)                      # (L, d_model)

    ref = reference_data_embedding(x, w_dck, pe)

    # f32 path: matches the f32 PyTorch module (up to accumulation order).
    out = jax.block_until_ready(data_embedding(x, w_kcd, pe))
    assert out.shape == (B, L, d_model)
    np.testing.assert_allclose(np.asarray(out), np.asarray(ref),
                               rtol=1e-5, atol=1e-4)

    # bf16-input / bf16-output memory-bound fast path: inputs cast in the
    # wrapper (halved DMA bytes); compare vs a bf16-cast-input reference.
    out_bf = jax.block_until_ready(
        data_embedding(x, w_kcd, pe,
                       compute_dtype=jnp.bfloat16, out_dtype=jnp.bfloat16))
    assert out_bf.dtype == jnp.bfloat16 and out_bf.shape == (B, L, d_model)
    x_b = x.astype(jnp.bfloat16).astype(jnp.float32)
    w_b = w_dck.astype(jnp.bfloat16).astype(jnp.float32)
    ref_bf = reference_data_embedding(x_b, w_b, pe)
    np.testing.assert_allclose(np.asarray(out_bf.astype(jnp.float32)),
                               np.asarray(ref_bf), rtol=5e-2, atol=5e-2)


if __name__ == "__main__":
    key = jax.random.PRNGKey(0)
    k1, k2 = jax.random.split(key)
    # Small shape implied by the module: batch=2, seq=16, c_in=4, d_model=32
    # (exercises the pad-to-128 lane-dense path).
    _run_case(k1, B=2, L=16, c_in=4, d_model=32)
    # Typical TSLib embedding shape (d_model=512, single lane-dense tile).
    _run_case(k2, B=2, L=96, c_in=7, d_model=512)
    print("KERNEL_OK")
</pallas_src>

<mosaic_0001>
module attributes {stable_mosaic.version = 11 : i64} {
  func.func @_data_embedding_kernel(%arg0: i32, %arg1: i32, %arg2: memref<1x16x4xf32, #tpu.memory_space<vmem>>, %arg3: memref<3x4x128xf32, #tpu.memory_space<vmem>>, %arg4: memref<16x128xf32, #tpu.memory_space<vmem>>, %arg5: memref<1x16x128xf32, #tpu.memory_space<vmem>>) attributes {dimension_semantics = [#tpu.dimension_semantics<parallel>, #tpu.dimension_semantics<parallel>], iteration_bounds = array<i64: 1, 2>, scalar_prefetch = 0 : i64, scratch_operands = 0 : i64, tpu.core_type = #tpu.core_type<tc>, window_params = [{transform_indices = @transform_0, window_bounds = array<i64: 1, 16, 4>}, {transform_indices = @transform_1, window_bounds = array<i64: 3, 4, 128>}, {transform_indices = @transform_2, window_bounds = array<i64: 16, 128>}, {transform_indices = @transform_3, window_bounds = array<i64: 1, 16, 128>}]} {
    %c0 = arith.constant 0 : index
    %c0_0 = arith.constant 0 : index
    %c0_1 = arith.constant 0 : index
    %0 = vector.load %arg3[%c0, %c0_0, %c0_1] : memref<3x4x128xf32, #tpu.memory_space<vmem>>, vector<1x4x128xf32>
    %1 = vector.shape_cast %0 : vector<1x4x128xf32> to vector<4x128xf32>
    %c1 = arith.constant 1 : index
    %c0_2 = arith.constant 0 : index
    %c0_3 = arith.constant 0 : index
    %2 = vector.load %arg3[%c1, %c0_2, %c0_3] : memref<3x4x128xf32, #tpu.memory_space<vmem>>, vector<1x4x128xf32>
    %3 = vector.shape_cast %2 : vector<1x4x128xf32> to vector<4x128xf32>
    %c2 = arith.constant 2 : index
    %c0_4 = arith.constant 0 : index
    %c0_5 = arith.constant 0 : index
    %4 = vector.load %arg3[%c2, %c0_4, %c0_5] : memref<3x4x128xf32, #tpu.memory_space<vmem>>, vector<1x4x128xf32>
    %5 = vector.shape_cast %4 : vector<1x4x128xf32> to vector<4x128xf32>
    %c0_6 = arith.constant 0 : index
    %c0_7 = arith.constant 0 : index
    %6 = vector.load %arg4[%c0_6, %c0_7] : memref<16x128xf32, #tpu.memory_space<vmem>>, vector<16x128xf32>
    %c0_8 = arith.constant 0 : index
    %c0_9 = arith.constant 0 : index
    %c0_10 = arith.constant 0 : index
    %7 = vector.load %arg2[%c0_8, %c0_9, %c0_10] : memref<1x16x4xf32, #tpu.memory_space<vmem>>, vector<1x16x4xf32>
    %8 = vector.shape_cast %7 : vector<1x16x4xf32> to vector<16x4xf32>
    %9 = vector.extract_strided_slice %8 {offsets = [15, 0], sizes = [1, 4], strides = [1, 1]} : vector<16x4xf32> to vector<1x4xf32>
    %10 = vector.extract_strided_slice %8 {offsets = [0, 0], sizes = [15, 4], strides = [1, 1]} : vector<16x4xf32> to vector<15x4xf32>
    %11 = tpu.concatenate %9, %10 in 0 : vector<1x4xf32>, vector<15x4xf32> -> vector<16x4xf32>
    %12 = vector.extract_strided_slice %8 {offsets = [1, 0], sizes = [15, 4], strides = [1, 1]} : vector<16x4xf32> to vector<15x4xf32>
    %13 = vector.extract_strided_slice %8 {offsets = [0, 0], sizes = [1, 4], strides = [1, 1]} : vector<16x4xf32> to vector<1x4xf32>
    %14 = tpu.concatenate %12, %13 in 0 : vector<15x4xf32>, vector<1x4xf32> -> vector<16x4xf32>
    %cst = arith.constant dense<0.000000e+00> : vector<16x128xf32>
    %15 = tpu.matmul %11, %1, %cst {dimension_numbers = #tpu.dot_dimension_numbers<[1], [0], [0], [1], [0, 0, 1, 1], [], []>} : vector<16x4xf32>, vector<4x128xf32>, vector<16x128xf32> -> vector<16x128xf32>
    %cst_11 = arith.constant dense<0.000000e+00> : vector<16x128xf32>
    %16 = tpu.matmul %8, %3, %cst_11 {dimension_numbers = #tpu.dot_dimension_numbers<[1], [0], [0], [1], [0, 0, 1, 1], [], []>} : vector<16x4xf32>, vector<4x128xf32>, vector<16x128xf32> -> vector<16x128xf32>
    %17 = arith.addf %15, %16 : vector<16x128xf32>
    %cst_12 = arith.constant dense<0.000000e+00> : vector<16x128xf32>
    %18 = tpu.matmul %14, %5, %cst_12 {dimension_numbers = #tpu.dot_dimension_numbers<[1], [0], [0], [1], [0, 0, 1, 1], [], []>} : vector<16x4xf32>, vector<4x128xf32>, vector<16x128xf32> -> vector<16x128xf32>
    %19 = arith.addf %17, %18 : vector<16x128xf32>
    %20 = arith.addf %19, %6 : vector<16x128xf32>
    %c0_13 = arith.constant 0 : index
    %c0_14 = arith.constant 0 : index
    %c0_15 = arith.constant 0 : index
    %21 = vector.load %arg5[%c0_13, %c0_14, %c0_15] : memref<1x16x128xf32, #tpu.memory_space<vmem>>, vector<1x16x128xf32>
    %22 = vector.shape_cast %21 : vector<1x16x128xf32> to vector<16x128xf32>
    %23 = vector.shape_cast %20 : vector<16x128xf32> to vector<1x16x128xf32>
    tpu.vector_store %arg5[%c0_13, %c0_14, %c0_15], %23 {strides = array<i32>} : memref<1x16x128xf32, #tpu.memory_space<vmem>>, vector<1x16x128xf32>,
    return
  }
  func.func @transform_0(%arg0: i32, %arg1: i32) -> (i32, i32, i32) {
    %c0_i32 = arith.constant 0 : i32
    %c0_i32_0 = arith.constant 0 : i32
    %c0_i32_1 = arith.constant 0 : i32
    return %arg1, %c0_i32, %c0_i32_0 : i32, i32, i32
  }
  func.func @transform_1(%arg0: i32, %arg1: i32) -> (i32, i32, i32) {
    %c0_i32 = arith.constant 0 : i32
    %c0_i32_0 = arith.constant 0 : i32
    %c0_i32_1 = arith.constant 0 : i32
    return %c0_i32, %c0_i32_0, %arg0 : i32, i32, i32
  }
  func.func @transform_2(%arg0: i32, %arg1: i32) -> (i32, i32) {
    %c0_i32 = arith.constant 0 : i32
    %c0_i32_0 = arith.constant 0 : i32
    return %c0_i32, %arg0 : i32, i32
  }
  func.func @transform_3(%arg0: i32, %arg1: i32) -> (i32, i32, i32) {
    %c0_i32 = arith.constant 0 : i32
    %c0_i32_0 = arith.constant 0 : i32
    return %arg1, %c0_i32, %arg0 : i32, i32, i32
  }
}

</mosaic_0001>

<llo_original>
// kernel: tpu_custom_call.1
$region0: #{tpu_custom_call.1}
  #allocation0 [shape = 'u32[]', space=smem, size = 0x4, offset = 0x4, fixed_abs, tag = 'smem constant byte address 0x4 - core index']
  #allocation1 [shape = 'u32[144,128]{1,0:T(1,128)}', space=vmem, size = 0x12000, scoped, tag = 'internal scratch']
  %s0 = inlined_call_operand.vmem [shape: f32[2,16,4], index: 0, kind: input, shape index: {}]
  %s1 = inlined_call_operand.vmem [shape: f32[3,4,128], index: 1, kind: input, shape index: {}]
  %s2 = inlined_call_operand.vmem [shape: f32[16,128], index: 2, kind: input, shape index: {}]
  %s3 = inlined_call_operand.hbm [shape: f32[2,16,128], index: 3, kind: output, shape index: {}]
  %s4 = sld [smem:[#allocation0]]
  $region45: #{tpu_custom_call.1} parent=0
    _
  %s6 = ssub.s32 1, %s4
  %s7 = scalar_select 0, %s6, %s4
  $region1: #{tpu_custom_call.1} parent=0
    #allocation2 [shape = 'u8[16384]{0}', space=vmem, size = 0x4000, scoped, tag = 'output window, operand 0']
    #allocation3 [shape = 's32[2]{0}', space=sflag, size = 0x8, scoped, tag = 'scoped memory for tpu_custom_call.1']
    %8 = vsyncpa [#allocation3], 0
    %s9 = scalar_lea.sflag [#allocation3], 1
    %10 = vsyncpa %s9, 0
    loop: start=0, step=1, limit=4
    $region2: #{tpu_custom_call.1} parent=1 // loop_pre_header
      _
    $region3: #{tpu_custom_call.1} parent=1 // loop_header
      %s12 = sphi 0, %s16
      %p13 = scmp.ge.s32.totalorder %s12, 4
      %s19 = sphi 0, %s31
      %s20 = sphi 0, %s27
      %s21 = sphi 0, %s19
      %s22 = sphi 0, %s20
      %s23 = sphi 0, %s21
      %s24 = sphi 0, %s22
      %s34 = sphi 0, %s36
      %s37 = sphi 0, %s34
      %s38 = sphi 0, %s37
      %s54 = sphi 0, %s38
      %s60 = sphi 0, %s62
      %s63 = sphi 0, %s60
      %s64 = sphi 0, %s63
      %s80 = sphi 0, %s64
      %s86 = sphi 0, %s88
      %s89 = sphi 0, %s86
      %s90 = sphi 0, %s89
      %s106 = sphi 0, %s90
      %s114 = sphi 0, %s116
      %s117 = sphi 0, %s114
      %s118 = sphi 0, %s117
      %s134 = sphi 0, %s118
    $region4: #{tpu_custom_call.1} parent=1 // loop_header_branch
      %15 = sbr.rel (%p13) target = $region8
    $region5: #{tpu_custom_call.1} parent=1 // loop_body
      %s17 = ssub.s32 %s12, 1
      %s18 = ssub.s32 %s12, 2
      %s25 = sadd.s32 1, %s20
      %p26 = scmp.ge.s32.totalorder %s25, 2
      %s27 = scalar_select %p26, 0, %s25
      %s28 = sadd.s32 1, %s19
      %s29 = scalar_select %p26, %s28, %s19
      %p30 = scmp.ge.s32.totalorder %s29, 1
      %s31 = scalar_select %p30, 0, %s29
      %s32 = ssub.s32 %s20, %s27
      %p33 = scmp.eq.s32.totalorder %s32, 0
      %s35 = sadd.s32 %s34, 1
      %s36 = scalar_select %p33, %s34, %s35
      %p39 = pneg %p33
      %p40 = scmp.eq.s32.totalorder %s12, 1
      %p41 = por %p39, %p40
      %p42 = scmp.ne.s32.totalorder %s34, %s37
      %p43 = scmp.eq.s32.totalorder %s12, 0
      %p44 = por %p42, %p43
      %p45 = scmp.ne.s32.totalorder %s34, %s37
      %p46 = scmp.eq.s32.totalorder %s17, 1
      %p47 = por %p45, %p46
      %p48 = scmp.ne.s32.totalorder %s37, %s38
      %p49 = scmp.eq.s32.totalorder %s17, 0
      %p50 = por %p48, %p49
      %p51 = scmp.ne.s32.totalorder %s37, %s38
      %p52 = scmp.eq.s32.totalorder %s18, 1
      %p53 = por %p51, %p52
      %p55 = scmp.ne.s32.totalorder %s38, %s54
      %p56 = scmp.eq.s32.totalorder %s18, 0
      %p57 = por %p55, %p56
      %s58 = ssub.s32 %s19, %s31
      %p59 = scmp.eq.s32.totalorder %s58, 0
      %s61 = sadd.s32 %s60, 1
      %s62 = scalar_select %p59, %s60, %s61
      %p65 = pneg %p59
      %p66 = scmp.eq.s32.totalorder %s12, 1
      %p67 = por %p65, %p66
      %p68 = scmp.ne.s32.totalorder %s60, %s63
      %p69 = scmp.eq.s32.totalorder %s12, 0
      %p70 = por %p68, %p69
      %p71 = scmp.ne.s32.totalorder %s60, %s63
      %p72 = scmp.eq.s32.totalorder %s17, 1
      %p73 = por %p71, %p72
      %p74 = scmp.ne.s32.totalorder %s63, %s64
      %p75 = scmp.eq.s32.totalorder %s17, 0
      %p76 = por %p74, %p75
      %p77 = scmp.ne.s32.totalorder %s63, %s64
      %p78 = scmp.eq.s32.totalorder %s18, 1
      %p79 = por %p77, %p78
      %p81 = scmp.ne.s32.totalorder %s64, %s80
      %p82 = scmp.eq.s32.totalorder %s18, 0
      %p83 = por %p81, %p82
      %s84 = ssub.s32 %s19, %s31
      %p85 = scmp.eq.s32.totalorder %s84, 0
      %s87 = sadd.s32 %s86, 1
      %s88 = scalar_select %p85, %s86, %s87
      %p91 = pneg %p85
      %p92 = scmp.eq.s32.totalorder %s12, 1
      %p93 = por %p91, %p92
      %p94 = scmp.ne.s32.totalorder %s86, %s89
      %p95 = scmp.eq.s32.totalorder %s12, 0
      %p96 = por %p94, %p95
      %p97 = scmp.ne.s32.totalorder %s86, %s89
      %p98 = scmp.eq.s32.totalorder %s17, 1
      %p99 = por %p97, %p98
      %p100 = scmp.ne.s32.totalorder %s89, %s90
      %p101 = scmp.eq.s32.totalorder %s17, 0
      %p102 = por %p100, %p101
      %p103 = scmp.ne.s32.totalorder %s89, %s90
      %p104 = scmp.eq.s32.totalorder %s18, 1
      %p105 = por %p103, %p104
      %p107 = scmp.ne.s32.totalorder %s90, %s106
      %p108 = scmp.eq.s32.totalorder %s18, 0
      %p109 = por %p107, %p108
      %s110 = ssub.s32 %s20, %s27
      %s111 = ssub.s32 %s19, %s31
      %s112 = sor.u32 %s110, %s111
      %p113 = scmp.eq.s32.totalorder %s112, 0
      %s115 = sadd.s32 %s114, 1
      %s116 = scalar_select %p113, %s114, %s115
      %p119 = pneg %p113
      %p120 = scmp.eq.s32.totalorder %s12, 1
      %p121 = por %p119, %p120
      %p122 = scmp.ne.s32.totalorder %s114, %s117
      %p123 = scmp.eq.s32.totalorder %s12, 0
      %p124 = por %p122, %p123
      %p125 = scmp.ne.s32.totalorder %s114, %s117
      %p126 = scmp.eq.s32.totalorder %s17, 1
      %p127 = por %p125, %p126
      %p128 = scmp.ne.s32.totalorder %s117, %s118
      %p129 = scmp.eq.s32.totalorder %s17, 0
      %p130 = por %p128, %p129
      %p131 = scmp.ne.s32.totalorder %s117, %s118
      %p132 = scmp.eq.s32.totalorder %s18, 1
      %p133 = por %p131, %p132
      %p135 = scmp.ne.s32.totalorder %s118, %s134
      %p136 = scmp.eq.s32.totalorder %s18, 0
      %p137 = por %p135, %p136
      %p138 = scmp.le.s32.totalorder 1, %s12
      %p139 = scmp.lt.s32.totalorder %s12, 3
      %p140 = pnand %p138, %p139
      %p141 = pneg %p140
      // Predicated region
      $region9: #{tpu_custom_call.1} parent=5 // pred_check
        _
      $region10: #{tpu_custom_call.1} parent=5 // pred_check_branch
        %143 = sbr.rel (%p140) target = $region12
      $region11: #{tpu_custom_call.1} parent=5 // pred_region
        %s144 = ssub.s32 %s12, 1
        // Predicated region
        $region13: #{tpu_custom_call.1} parent=11 // pred_check
          %p145 = pneg %p76
        $region14: #{tpu_custom_call.1} parent=11 // pred_check_branch
          %147 = sbr.rel (%p145) target = $region16
        $region15: #{tpu_custom_call.1} parent=11 // pred_region
          %p148 = scmp.lt.s32.totalorder %s21, 0
          %s149 = scalar_select %p148, %s21, 0
          %s150 = smul.addr %s149, 4
          %s151 = scalar_lea.vmem %s1, %s150
        $region16: #{tpu_custom_call.1} parent=11 // pred_fallthru
          _
        // Predicated region
        $region17: #{tpu_custom_call.1} parent=11 // pred_check
          %p152 = pneg %p102
        $region18: #{tpu_custom_call.1} parent=11 // pred_check_branch
          %154 = sbr.rel (%p152) target = $region20
        $region19: #{tpu_custom_call.1} parent=11 // pred_region
          %p155 = scmp.lt.s32.totalorder %s21, 0
          %s156 = scalar_select %p155, %s21, 0
          %s157 = smul.addr %s156, 8
          %s158 = scalar_lea.vmem %s2, %s157
        $region20: #{tpu_custom_call.1} parent=11 // pred_fallthru
          _
      $region12: #{tpu_custom_call.1} parent=5 // pred_fallthru
        _
      %p159 = scmp.lt.s32.totalorder %s12, 2
      // Predicated region
      $region21: #{tpu_custom_call.1} parent=5 // pred_check
        %p160 = pneg %p159
      $region22: #{tpu_custom_call.1} parent=5 // pred_check_branch
        %162 = sbr.rel (%p160) target = $region24
      $region23: #{tpu_custom_call.1} parent=5 // pred_region
        // Predicated region
        $region25: #{tpu_custom_call.1} parent=23 // pred_check
          %p163 = pneg %p44
        $region26: #{tpu_custom_call.1} parent=23 // pred_check_branch
          %165 = sbr.rel (%p163) target = $region28
        $region27: #{tpu_custom_call.1} parent=23 // pred_region
          %p166 = scmp.lt.s32.totalorder %s20, 1
          %s167 = scalar_select %p166, %s20, 1
          %s168 = smul.addr %s167, 2
          %s169 = smul.addr %s168, 8
          %s170 = scalar_lea.vmem %s0, %s169
        $region28: #{tpu_custom_call.1} parent=23 // pred_fallthru
          _
      $region24: #{tpu_custom_call.1} parent=5 // pred_fallthru
        _
      %p171 = scmp.le.s32.totalorder 1, %s12
      %p172 = scmp.lt.s32.totalorder %s12, 3
      %p173 = pnand %p171, %p172
      %p174 = pneg %p173
      // Predicated region
      $region29: #{tpu_custom_call.1} parent=5 // pred_check
        _
      $region30: #{tpu_custom_call.1} parent=5 // pred_check_branch
        %176 = sbr.rel (%p173) target = $region32
      $region31: #{tpu_custom_call.1} parent=5 // pred_region
        %s177 = ssub.s32 %s12, 1
        %p178 = scmp.lt.s32.totalorder %s22, 1
        %s179 = scalar_select %p178, %s22, 1
        %s180 = smul.addr %s179, 2
        %s181 = smul.addr %s180, 8
        %s182 = scalar_lea.vmem %s0, %s181
        %p183 = pneg %p50
        %p184 = pneg %p47
        %p185 = scmp.lt.s32.totalorder %s21, 0
        %s186 = scalar_select %p185, %s21, 0
        %s187 = smul.addr %s186, 4
        %s188 = scalar_lea.vmem %s1, %s187
        %p189 = pneg %p76
        %p190 = pneg %p73
        %p191 = scmp.lt.s32.totalorder %s21, 0
        %s192 = scalar_select %p191, %s21, 0
        %s193 = smul.addr %s192, 8
        %s194 = scalar_lea.vmem %s2, %s193
        %p195 = pneg %p102
        %p196 = pneg %p99
        %p197 = pneg %p130
        %p198 = pneg %p127
        %s199 = sand.u32 %s117, 1
        %s200 = scalar_lea.sflag [#allocation3], %s199
        %s201 = sand.u32 %s117, 1
        %s202 = smul.addr %s201, 16
        %s203 = scalar_lea.vmem [#allocation2], %s202
        %p204 = scmp.lt.s32.totalorder %s22, 1
        %s205 = scalar_select %p204, %s22, 1
        %s206 = smul.addr %s205, 2
        %s207 = smul.addr %s206, 8
        %s208 = scalar_lea.vmem %s0, %s207
        %p209 = scmp.lt.s32.totalorder %s21, 0
        %s210 = scalar_select %p209, %s21, 0
        %s211 = smul.addr %s210, 4
        %s212 = scalar_lea.vmem %s1, %s211
        %p213 = scmp.lt.s32.totalorder %s21, 0
        %s214 = scalar_select %p213, %s21, 0
        %s215 = smul.addr %s214, 8
        %s216 = scalar_lea.vmem %s2, %s215
        %v217 = vld [vmem:[%s212] sm:$0xf]
        %s218 = scalar_lea.vmem %s212, 4
        %v219 = vld [vmem:[%s218] sm:$0xf]
        %s220 = scalar_lea.vmem %s212, 8
        %v221 = vld [vmem:[%s220] sm:$0xf]
        %v222 = vld [vmem:[%s216] sm:$0xff]
        %v223 = vld [vmem:[%s216 + $0x8] sm:$0xff]
        %v224 = vld [vmem:[%s208] sm:$0xff]
        %v225 = vld [vmem:[%s208 + $0x8] sm:$0xff]
        %v227 = vrot.slane %v225, 7
        %vm230 = vcmask 1040384
        %v231 = vrot.slane %v224, 7
        %v232 = vsel %vm230, %v231, %v227
        %v234 = vsel %vm230, %v227, %v231
        %vm235 = vcmask 1046528
        %v236 = vrot.slane %v224, 1
        %v237 = vrot.slane %v225, 1
        %v238 = vsel %vm235, %v236, %v237
        %v241 = vsel %vm235, %v237, %v236
        %vm242 = vcmask 31744
        %v243 = vsel %vm242, %v224, 0
        %v245 = vsel %vm242, %v225, 0
        %vm247 = vcmask 1043456
        %v249 = vsel %vm247, %v219, 0
        %251 = vmatprep.subr.mxu0 0.0
        %252 = vmatpush1.msra.mxu0 %v249
        %253 = vmatprep.subr.mxu0 0.0
        %254 = vmatpush1.msra.mxu0 0.0
        %255 = vmatprep.subr.mxu0 0.0
        %256 = vmatpush1.msra.mxu0 0.0
        %257 = vmatprep.subr.mxu0 0.0
        %258 = vmatpush1.msra.mxu0 0.0
        %259 = vmatprep.subr.mxu0 0.0
        %260 = vmatpush1.msra.mxu0 0.0
        %261 = vmatprep.subr.mxu0 0.0
        %262 = vmatpush1.msra.mxu0 0.0
        %263 = vmatprep.subr.mxu0 0.0
        %264 = vmatpush1.msra.mxu0 0.0
        %265 = vmatprep.subr.mxu0 0.0
        %266 = vmatpush1.msra.mxu0 0.0
        %267 = vmatprep.subr.mxu0 0.0
        %268 = vmatpush1.msra.mxu0 0.0
        %269 = vmatprep.subr.mxu0 0.0
        %270 = vmatpush1.msra.mxu0 0.0
        %271 = vmatprep.subr.mxu0 0.0
        %272 = vmatpush1.msra.mxu0 0.0
        %273 = vmatprep.subr.mxu0 0.0
        %274 = vmatpush1.msra.mxu0 0.0
        %275 = vmatprep.subr.mxu0 0.0
        %276 = vmatpush1.msra.mxu0 0.0
        %277 = vmatprep.subr.mxu0 0.0
        %278 = vmatpush1.msra.mxu0 0.0
        %279 = vmatprep.subr.mxu0 0.0
        %280 = vmatpush1.msra.mxu0 0.0
        %281 = vmatprep.subr.mxu0 0.0
        %282 = vmatpush1.msra.mxu0 0.0
        %283 = vmatprep.subr.mxu0 0.0
        %284 = vmatpush1.msra.mxu0 0.0
        %285 = vmatprep.subr.mxu0 0.0
        %286 = vmatpush1.msra.mxu0 0.0
        %287 = vmatprep.subr.mxu0 0.0
        %288 = vmatpush1.msra.mxu0 0.0
        %289 = vmatprep.subr.mxu0 0.0
        %290 = vmatpush1.msra.mxu0 0.0
        %291 = vmatprep.subr.mxu0 0.0
        %292 = vmatpush1.msra.mxu0 0.0
        %293 = vmatprep.subr.mxu0 0.0
        %294 = vmatpush1.msra.mxu0 0.0
        %295 = vmatprep.subr.mxu0 0.0
        %296 = vmatpush1.msra.mxu0 0.0
        %297 = vmatprep.subr.mxu0 0.0
        %298 = vmatpush1.msra.mxu0 0.0
        %299 = vmatprep.subr.mxu0 0.0
        %300 = vmatpush1.msra.mxu0 0.0
        %301 = vmatprep.subr.mxu0 0.0
        %302 = vmatpush1.msra.mxu0 0.0
        %303 = vmatprep.subr.mxu0 0.0
        %304 = vmatpush1.msra.mxu0 0.0
        %305 = vmatprep.subr.mxu0 0.0
        %306 = vmatpush1.msra.mxu0 0.0
        %307 = vmatprep.subr.mxu0 0.0
        %308 = vmatpush1.msra.mxu0 0.0
        %309 = vmatprep.subr.mxu0 0.0
        %310 = vmatpush1.msra.mxu0 0.0
        %311 = vmatprep.subr.mxu0 0.0
        %312 = vmatpush1.msra.mxu0 0.0
        %313 = vmatprep.subr.mxu0 0.0
        %314 = vmatpush1.msra.mxu0 0.0
        %315 = vmatprep.mubr.f32.mxu0 0.0
        %316 = vmatmul.mubr.f32.gmra.mrb[0].mxu0 %v243
        %v317 = vpop.f32.mrb[0].mxu0
        %v318 = vadd.f32 0.0, %v317
        %v319 = vpop.f32.mrb[0].mxu0
        %320 = vmatprep.mubr.f32.mxu0 0.0
        %321 = vmatmul.mubr.f32.gmra.mrb[0].mxu0 %v245
        %v322 = vpop.f32.mrb[0].mxu0
        %v323 = vadd.f32 0.0, %v322
        %v324 = vpop.f32.mrb[0].mxu0
        %325 = vdwg.mxu0
        %v327 = vsel %vm242, %v234, 0
        %v329 = vsel %vm242, %v232, 0
        %v332 = vsel %vm247, %v217, 0
        %334 = vmatprep.subr.mxu0 0.0
        %335 = vmatpush1.msra.mxu0 %v332
        %336 = vmatprep.subr.mxu0 0.0
        %337 = vmatpush1.msra.mxu0 0.0
        %338 = vmatprep.subr.mxu0 0.0
        %339 = vmatpush1.msra.mxu0 0.0
        %340 = vmatprep.subr.mxu0 0.0
        %341 = vmatpush1.msra.mxu0 0.0
        %342 = vmatprep.subr.mxu0 0.0
        %343 = vmatpush1.msra.mxu0 0.0
        %344 = vmatprep.subr.mxu0 0.0
        %345 = vmatpush1.msra.mxu0 0.0
        %346 = vmatprep.subr.mxu0 0.0
        %347 = vmatpush1.msra.mxu0 0.0
        %348 = vmatprep.subr.mxu0 0.0
        %349 = vmatpush1.msra.mxu0 0.0
        %350 = vmatprep.subr.mxu0 0.0
        %351 = vmatpush1.msra.mxu0 0.0
        %352 = vmatprep.subr.mxu0 0.0
        %353 = vmatpush1.msra.mxu0 0.0
        %354 = vmatprep.subr.mxu0 0.0
        %355 = vmatpush1.msra.mxu0 0.0
        %356 = vmatprep.subr.mxu0 0.0
        %357 = vmatpush1.msra.mxu0 0.0
        %358 = vmatprep.subr.mxu0 0.0
        %359 = vmatpush1.msra.mxu0 0.0
        %360 = vmatprep.subr.mxu0 0.0
        %361 = vmatpush1.msra.mxu0 0.0
        %362 = vmatprep.subr.mxu0 0.0
        %363 = vmatpush1.msra.mxu0 0.0
        %364 = vmatprep.subr.mxu0 0.0
        %365 = vmatpush1.msra.mxu0 0.0
        %366 = vmatprep.subr.mxu0 0.0
        %367 = vmatpush1.msra.mxu0 0.0
        %368 = vmatprep.subr.mxu0 0.0
        %369 = vmatpush1.msra.mxu0 0.0
        %370 = vmatprep.subr.mxu0 0.0
        %371 = vmatpush1.msra.mxu0 0.0
        %372 = vmatprep.subr.mxu0 0.0
        %373 = vmatpush1.msra.mxu0 0.0
        %374 = vmatprep.subr.mxu0 0.0
        %375 = vmatpush1.msra.mxu0 0.0
        %376 = vmatprep.subr.mxu0 0.0
        %377 = vmatpush1.msra.mxu0 0.0
        %378 = vmatprep.subr.mxu0 0.0
        %379 = vmatpush1.msra.mxu0 0.0
        %380 = vmatprep.subr.mxu0 0.0
        %381 = vmatpush1.msra.mxu0 0.0
        %382 = vmatprep.subr.mxu0 0.0
        %383 = vmatpush1.msra.mxu0 0.0
        %384 = vmatprep.subr.mxu0 0.0
        %385 = vmatpush1.msra.mxu0 0.0
        %386 = vmatprep.subr.mxu0 0.0
        %387 = vmatpush1.msra.mxu0 0.0
        %388 = vmatprep.subr.mxu0 0.0
        %389 = vmatpush1.msra.mxu0 0.0
        %390 = vmatprep.subr.mxu0 0.0
        %391 = vmatpush1.msra.mxu0 0.0
        %392 = vmatprep.subr.mxu0 0.0
        %393 = vmatpush1.msra.mxu0 0.0
        %394 = vmatprep.subr.mxu0 0.0
        %395 = vmatpush1.msra.mxu0 0.0
        %396 = vmatprep.subr.mxu0 0.0
        %397 = vmatpush1.msra.mxu0 0.0
        %398 = vmatprep.mubr.f32.mxu0 0.0
        %399 = vmatmul.mubr.f32.gmra.mrb[0].mxu0 %v327
        %v400 = vpop.f32.mrb[0].mxu0
        %v401 = vadd.f32 %v318, %v400
        %v402 = vpop.f32.mrb[0].mxu0
        %403 = vmatprep.mubr.f32.mxu0 0.0
        %404 = vmatmul.mubr.f32.gmra.mrb[0].mxu0 %v329
        %v405 = vpop.f32.mrb[0].mxu0
        %v406 = vadd.f32 %v323, %v405
        %v407 = vpop.f32.mrb[0].mxu0
        %408 = vdwg.mxu0
        %v409 = vsel %vm242, %v238, 0
        %v412 = vsel %vm242, %v241, 0
        %v415 = vsel %vm247, %v221, 0
        %417 = vmatprep.subr.mxu0 0.0
        %418 = vmatpush1.msra.mxu0 %v415
        %419 = vmatprep.subr.mxu0 0.0
        %420 = vmatpush1.msra.mxu0 0.0
        %421 = vmatprep.subr.mxu0 0.0
        %422 = vmatpush1.msra.mxu0 0.0
        %423 = vmatprep.subr.mxu0 0.0
        %424 = vmatpush1.msra.mxu0 0.0
        %425 = vmatprep.subr.mxu0 0.0
        %426 = vmatpush1.msra.mxu0 0.0
        %427 = vmatprep.subr.mxu0 0.0
        %428 = vmatpush1.msra.mxu0 0.0
        %429 = vmatprep.subr.mxu0 0.0
        %430 = vmatpush1.msra.mxu0 0.0
        %431 = vmatprep.subr.mxu0 0.0
        %432 = vmatpush1.msra.mxu0 0.0
        %433 = vmatprep.subr.mxu0 0.0
        %434 = vmatpush1.msra.mxu0 0.0
        %435 = vmatprep.subr.mxu0 0.0
        %436 = vmatpush1.msra.mxu0 0.0
        %437 = vmatprep.subr.mxu0 0.0
        %438 = vmatpush1.msra.mxu0 0.0
        %439 = vmatprep.subr.mxu0 0.0
        %440 = vmatpush1.msra.mxu0 0.0
        %441 = vmatprep.subr.mxu0 0.0
        %442 = vmatpush1.msra.mxu0 0.0
        %443 = vmatprep.subr.mxu0 0.0
        %444 = vmatpush1.msra.mxu0 0.0
        %445 = vmatprep.subr.mxu0 0.0
        %446 = vmatpush1.msra.mxu0 0.0
        %447 = vmatprep.subr.mxu0 0.0
        %448 = vmatpush1.msra.mxu0 0.0
        %449 = vmatprep.subr.mxu0 0.0
        %450 = vmatpush1.msra.mxu0 0.0
        %451 = vmatprep.subr.mxu0 0.0
        %452 = vmatpush1.msra.mxu0 0.0
        %453 = vmatprep.subr.mxu0 0.0
        %454 = vmatpush1.msra.mxu0 0.0
        %455 = vmatprep.subr.mxu0 0.0
        %456 = vmatpush1.msra.mxu0 0.0
        %457 = vmatprep.subr.mxu0 0.0
        %458 = vmatpush1.msra.mxu0 0.0
        %459 = vmatprep.subr.mxu0 0.0
        %460 = vmatpush1.msra.mxu0 0.0
        %461 = vmatprep.subr.mxu0 0.0
        %462 = vmatpush1.msra.mxu0 0.0
        %463 = vmatprep.subr.mxu0 0.0
        %464 = vmatpush1.msra.mxu0 0.0
        %465 = vmatprep.subr.mxu0 0.0
        %466 = vmatpush1.msra.mxu0 0.0
        %467 = vmatprep.subr.mxu0 0.0
        %468 = vmatpush1.msra.mxu0 0.0
        %469 = vmatprep.subr.mxu0 0.0
        %470 = vmatpush1.msra.mxu0 0.0
        %471 = vmatprep.subr.mxu0 0.0
        %472 = vmatpush1.msra.mxu0 0.0
        %473 = vmatprep.subr.mxu0 0.0
        %474 = vmatpush1.msra.mxu0 0.0
        %475 = vmatprep.subr.mxu0 0.0
        %476 = vmatpush1.msra.mxu0 0.0
        %477 = vmatprep.subr.mxu0 0.0
        %478 = vmatpush1.msra.mxu0 0.0
        %479 = vmatprep.subr.mxu0 0.0
        %480 = vmatpush1.msra.mxu0 0.0
        %481 = vmatprep.mubr.f32.mxu0 0.0
        %482 = vmatmul.mubr.f32.gmra.mrb[0].mxu0 %v409
        %v483 = vpop.f32.mrb[0].mxu0
        %v484 = vadd.f32 0.0, %v483
        %v485 = vpop.f32.mrb[0].mxu0
        %486 = vmatprep.mubr.f32.mxu0 0.0
        %487 = vmatmul.mubr.f32.gmra.mrb[0].mxu0 %v412
        %v488 = vpop.f32.mrb[0].mxu0
        %v489 = vadd.f32 0.0, %v488
        %v490 = vpop.f32.mrb[0].mxu0
        %491 = vdwg.mxu0
        %v492 = vadd.f32 %v401, %v484
        %v493 = vadd.f32 %v406, %v489
        %v494 = vadd.f32 %v492, %v222
        %v495 = vadd.f32 %v493, %v223
        %496 = vst [vmem:[%s203] sm:$0xff] %v494
        %497 = vst [vmem:[%s203 + $0x8] sm:$0xff] %v495
        %s498 = sand.u32 %s117, 1
        %s499 = scalar_lea.sflag [#allocation3], %s498
        %s500 = sand.u32 %s117, 1
        %s501 = smul.addr %s500, 16
        %s502 = scalar_lea.vmem [#allocation2], %s501
        // Predicated region
        $region33: #{tpu_custom_call.1} parent=31 // pred_check
          %p503 = pneg %p127
        $region34: #{tpu_custom_call.1} parent=31 // pred_check_branch
          %505 = sbr.rel (%p503) target = $region36
        $region35: #{tpu_custom_call.1} parent=31 // pred_region
          %s507 = ssub.s32 256, 256
          %508 = vsyncadd %s499, %s507
          %s509 = smul.addr %s22, 2
          %s510 = sadd.s32 %s21, %s509
          %s511 = smul.addr %s510, 128
          %s512 = scalar_lea.hbm %s3, %s511
          %s513 = sshll.u32 %s502, 4
          %s514 = int_to_ptr.vmem [resolvable:$true] %s513
          %519 = dma.vmem_to_hbm [thread:$0]  %s514, 256, %s512, %s499, 128, 128, 8
        $region36: #{tpu_custom_call.1} parent=31 // pred_fallthru
          _
      $region32: #{tpu_custom_call.1} parent=5 // pred_fallthru
        _
      %p520 = scmp.le.s32.totalorder 2, %s12
      // Predicated region
      $region37: #{tpu_custom_call.1} parent=5 // pred_check
        %p521 = pneg %p520
      $region38: #{tpu_custom_call.1} parent=5 // pred_check_branch
        %523 = sbr.rel (%p521) target = $region40
      $region39: #{tpu_custom_call.1} parent=5 // pred_region
        %s524 = ssub.s32 %s12, 2
        // Predicated region
        $region41: #{tpu_custom_call.1} parent=39 // pred_check
          %p525 = pneg %p133
        $region42: #{tpu_custom_call.1} parent=39 // pred_check_branch
          %527 = sbr.rel (%p525) target = $region44
        $region43: #{tpu_custom_call.1} parent=39 // pred_region
          %s528 = sand.u32 %s118, 1
          %s529 = scalar_lea.sflag [#allocation3], %s528
          %s530 = sand.u32 %s118, 1
          %s531 = smul.addr %s530, 16
          %s532 = scalar_lea.vmem [#allocation2], %s531
          %533 = dma.done %s529, 256
        $region44: #{tpu_custom_call.1} parent=39 // pred_fallthru
          _
      $region40: #{tpu_custom_call.1} parent=5 // pred_fallthru
        _
    $region6: #{tpu_custom_call.1} parent=1 // loop_footer
      %s16 = sadd.s32 1, %s12
    $region7: #{tpu_custom_call.1} parent=1 // loop_footer_branch
      %11 = sbr.rel target = $region3
    $region8: #{tpu_custom_call.1} parent=1 // loop_exit
      _
    %534 = vsyncpa [#allocation3], 1
    %s535 = scalar_lea.sflag [#allocation3], 1
    %536 = vsyncpa %s535, 1

</llo_original>
